<compile_context>
chip_gen: v7x
topology: tpu7x:2x2x1
jax: 0.10.0
libtpu: 0.0.40
codegen_flags: <defaults>
</compile_context>

<pallas_src>
import functools
import math

import jax
import jax.numpy as jnp
from jax.experimental import pallas as pl
from jax.experimental.pallas import tpu as pltpu

EPS = 1e-6  # torchtune RMSNorm default
NEG_INF = -1e30


def _rmsnorm(v, scale):
    ms = jnp.mean(v * v, axis=-1, keepdims=True)
    return v * jax.lax.rsqrt(ms + EPS) * scale


# ----------------------- kernel 1: RMSNorm + QKV + RoPE -----------------------
def _qkv_rope_kernel(n_heads, head_dim,
                     x_ref, cos_ref, sin_ref, scale_ref,
                     wq_ref, wk_ref, wv_ref,
                     q_out, k_out, v_out):
    hd = head_dim
    hd2 = hd // 2

    x = x_ref[...].astype(jnp.float32)                       # [TS, D]
    xn = _rmsnorm(x, scale_ref[...].astype(jnp.float32)).astype(jnp.bfloat16)

    q = jnp.dot(xn, wq_ref[...], preferred_element_type=jnp.float32)   # [TS, D] f32
    k = jnp.dot(xn, wk_ref[...], preferred_element_type=jnp.float32)
    v = jnp.dot(xn, wv_ref[...], preferred_element_type=jnp.float32)

    cos = cos_ref[...]                                        # [TS, hd2] f32
    sin = sin_ref[...]

    # RoPE rotate-half on the de-interleaved per-head layout (columns permuted in wrapper).
    q_parts, k_parts = [], []
    for h in range(n_heads):                                  # static, small head count
        lo = h * hd
        q1, q2 = q[:, lo:lo + hd2], q[:, lo + hd2:lo + hd]
        k1, k2 = k[:, lo:lo + hd2], k[:, lo + hd2:lo + hd]
        q_parts += [q1 * cos - q2 * sin, q2 * cos + q1 * sin]
        k_parts += [k1 * cos - k2 * sin, k2 * cos + k1 * sin]

    q_out[...] = jnp.concatenate(q_parts, axis=-1).astype(q_out.dtype)
    k_out[...] = jnp.concatenate(k_parts, axis=-1).astype(k_out.dtype)
    v_out[...] = v.astype(v_out.dtype)


# ------------- kernel 2: flash attention + o-projection + residual ------------
def _attn_kernel(n_heads, head_dim,
                 x_ref, q_ref, k_ref, v_ref, wo_ref,
                 o_ref, acc_ref, m_ref, l_ref):
    hd = head_dim
    TQ = q_ref.shape[0]
    TKV = k_ref.shape[0]
    qi = pl.program_id(1)
    kv = pl.program_id(2)
    n_kv = pl.num_programs(2)

    @pl.when(kv == 0)
    def _init():
        acc_ref[...] = jnp.zeros(acc_ref.shape, acc_ref.dtype)
        m_ref[...] = jnp.full(m_ref.shape, NEG_INF, m_ref.dtype)
        l_ref[...] = jnp.zeros(l_ref.shape, l_ref.dtype)

    q_start = qi * TQ
    kv_start = kv * TKV

    # Skip tiles that are entirely above the causal diagonal.
    @pl.when(kv_start <= q_start + TQ - 1)
    def _compute():
        q = q_ref[...]                                        # bf16 [TQ, D]
        k = k_ref[...]                                        # bf16 [TKV, D]
        v = v_ref[...]                                        # bf16 [TKV, D]

        # Causal mask built once per (q-tile, kv-tile), shared by all heads.
        row = q_start + jax.lax.broadcasted_iota(jnp.int32, (TQ, TKV), 0)
        col = kv_start + jax.lax.broadcasted_iota(jnp.int32, (TQ, TKV), 1)
        causal = col <= row

        inv_sqrt_d = 1.0 / math.sqrt(hd)
        dn = (((1,), (1,)), ((), ()))                          # q @ k^T

        for h in range(n_heads):                               # static head loop
            lo = h * hd
            s = jax.lax.dot_general(q[:, lo:lo + hd], k[:, lo:lo + hd], dn,
                                    preferred_element_type=jnp.float32)
            s = s * inv_sqrt_d
            s = jnp.where(causal, s, NEG_INF)

            m_prev = m_ref[:, h:h + 1]
            l_prev = l_ref[:, h:h + 1]
            m_new = jnp.maximum(m_prev, jnp.max(s, axis=-1, keepdims=True))
            alpha = jnp.exp(m_prev - m_new)
            p = jnp.exp(s - m_new)

            l_ref[:, h:h + 1] = alpha * l_prev + jnp.sum(p, axis=-1, keepdims=True)
            acc_ref[:, lo:lo + hd] = alpha * acc_ref[:, lo:lo + hd] + jnp.dot(
                p.astype(jnp.bfloat16), v[:, lo:lo + hd],
                preferred_element_type=jnp.float32)
            m_ref[:, h:h + 1] = m_new

    @pl.when(kv == n_kv - 1)
    def _finalize():
        inv_l = pl.reciprocal(l_ref[...], approx=True)         # [TQ, n_heads]
        o_parts = [acc_ref[:, h * hd:(h + 1) * hd] * inv_l[:, h:h + 1]
                   for h in range(n_heads)]
        o = jnp.concatenate(o_parts, axis=-1).astype(jnp.bfloat16)   # [TQ, D]
        attn = jnp.dot(o, wo_ref[...], preferred_element_type=jnp.float32)  # single K=D matmul
        o_ref[...] = (x_ref[...].astype(jnp.float32) + attn).astype(o_ref.dtype)


# ------------------- kernel 3: RMSNorm + SwiGLU MLP + residual -----------------
def _mlp_kernel(h_ref, scale_ref, w1_ref, w3_ref, w2_ref, o_ref, acc_ref):
    hk = pl.program_id(2)
    n_hk = pl.num_programs(2)

    @pl.when(hk == 0)
    def _init():
        acc_ref[...] = jnp.zeros(acc_ref.shape, acc_ref.dtype)

    hres = h_ref[...].astype(jnp.float32)                      # [TS, D]
    hn = _rmsnorm(hres, scale_ref[...].astype(jnp.float32)).astype(jnp.bfloat16)

    g = jnp.dot(hn, w1_ref[...], preferred_element_type=jnp.float32)   # [TS, TH]
    u = jnp.dot(hn, w3_ref[...], preferred_element_type=jnp.float32)
    gated = (g * jax.lax.logistic(g) * u).astype(jnp.bfloat16)          # silu via EUP
    acc_ref[...] += jnp.dot(gated, w2_ref[...], preferred_element_type=jnp.float32)

    @pl.when(hk == n_hk - 1)
    def _finalize():
        o_ref[...] = (hres + acc_ref[...]).astype(o_ref.dtype)


# ---------------------------------- wrapper ------------------------------------
def transformer_decoder_layer(x, params, *, n_heads, head_dim):
    B, S, D = x.shape
    H = params["w1"].shape[1]
    hd = head_dim
    hd2 = hd // 2
    assert n_heads * hd == D

    # Tile sizes (re-derive for your chip; headroom for double-buffering is kept).
    TS = S if S <= 128 else 128
    TQ = S if S <= 128 else 128
    TKV = S if S <= 128 else 128
    TH = H if H <= 512 else 512
    assert S % TS == 0 and S % TQ == 0 and S % TKV == 0 and H % TH == 0

    bf16 = jnp.bfloat16

    # De-interleave q/k projection output features per head (even | odd) so the
    # kernel can apply RoPE with contiguous slices. Scores are invariant to a
    # consistent permutation of q/k head features; v / wo are untouched.
    perm = []
    for h in range(n_heads):
        perm += [h * hd + 2 * j for j in range(hd2)]
        perm += [h * hd + 2 * j + 1 for j in range(hd2)]
    perm = jnp.asarray(perm, dtype=jnp.int32)
    wq_b = params["wq"][:, perm].astype(bf16)
    wk_b = params["wk"][:, perm].astype(bf16)
    wv_b = params["wv"].astype(bf16)
    wo_b = params["wo"].astype(bf16)
    w1_b = params["w1"].astype(bf16)
    w3_b = params["w3"].astype(bf16)
    w2_b = params["w2"].astype(bf16)
    sa_scale = params["sa_scale"].reshape(1, D).astype(jnp.float32)
    mlp_scale = params["mlp_scale"].reshape(1, D).astype(jnp.float32)

    # RoPE tables (input_pos=None -> positions are token indices), base 10000.
    pos = jnp.arange(S, dtype=jnp.float32)
    theta = 1.0 / (10000.0 ** (jnp.arange(hd2, dtype=jnp.float32) * 2.0 / hd))
    ang = pos[:, None] * theta[None, :]
    cos = jnp.cos(ang).astype(jnp.float32)   # [S, hd2]
    sin = jnp.sin(ang).astype(jnp.float32)

    cparams2 = functools.partial(pltpu.CompilerParams,
                                 vmem_limit_bytes=32 * 1024 * 1024)

    # -------- call 1: RMSNorm + QKV projection + RoPE --------------------------
    q_rot, k_rot, v = pl.pallas_call(
        functools.partial(_qkv_rope_kernel, n_heads, hd),
        out_shape=(jax.ShapeDtypeStruct((B, S, D), bf16),
                   jax.ShapeDtypeStruct((B, S, D), bf16),
                   jax.ShapeDtypeStruct((B, S, D), bf16)),
        grid_spec=pltpu.PrefetchScalarGridSpec(
            num_scalar_prefetch=0,
            grid=(B, S // TS),
            in_specs=[
                pl.BlockSpec((None, TS, D), lambda b, si: (b, si, 0)),   # x tile
                pl.BlockSpec((TS, hd2), lambda b, si: (si, 0)),          # cos
                pl.BlockSpec((TS, hd2), lambda b, si: (si, 0)),          # sin
                pl.BlockSpec((1, D), lambda b, si: (0, 0)),              # sa_scale
                pl.BlockSpec((D, D), lambda b, si: (0, 0)),              # wq (permuted, bf16)
                pl.BlockSpec((D, D), lambda b, si: (0, 0)),              # wk (permuted, bf16)
                pl.BlockSpec((D, D), lambda b, si: (0, 0)),              # wv (bf16)
            ],
            out_specs=[pl.BlockSpec((None, TS, D), lambda b, si: (b, si, 0))] * 3,
        ),
        compiler_params=cparams2(dimension_semantics=("parallel", "parallel")),
    )(x, cos, sin, sa_scale, wq_b, wk_b, wv_b)

    # -------- call 2: flash attention + o-projection + residual ----------------
    def kv_map(b, qi, kv):
        # Clamp so fully-masked (above-diagonal) kv tiles never trigger a fresh DMA.
        last_needed = (qi * TQ + TQ - 1) // TKV
        return (b, jnp.minimum(kv, last_needed), 0)

    h_res = pl.pallas_call(
        functools.partial(_attn_kernel, n_heads, hd),
        out_shape=jax.ShapeDtypeStruct((B, S, D), jnp.float32),
        grid_spec=pltpu.PrefetchScalarGridSpec(
            num_scalar_prefetch=0,
            grid=(B, S // TQ, S // TKV),
            in_specs=[
                pl.BlockSpec((None, TQ, D), lambda b, qi, kv: (b, qi, 0)),   # x (residual)
                pl.BlockSpec((None, TQ, D), lambda b, qi, kv: (b, qi, 0)),   # q_rot
                pl.BlockSpec((None, TKV, D), kv_map),                        # k_rot
                pl.BlockSpec((None, TKV, D), kv_map),                        # v
                pl.BlockSpec((D, D), lambda b, qi, kv: (0, 0)),              # wo (bf16)
            ],
            out_specs=pl.BlockSpec((None, TQ, D), lambda b, qi, kv: (b, qi, 0)),
            scratch_shapes=[
                pltpu.VMEM((TQ, D), jnp.float32),          # acc (all heads)
                pltpu.VMEM((TQ, n_heads), jnp.float32),    # running max m
                pltpu.VMEM((TQ, n_heads), jnp.float32),    # running sum l
            ],
        ),
        compiler_params=cparams2(
            dimension_semantics=("parallel", "parallel", "arbitrary")),
    )(x, q_rot, k_rot, v, wo_b)

    # -------- call 3: RMSNorm + SwiGLU MLP (H tiled) + residual ----------------
    out = pl.pallas_call(
        _mlp_kernel,
        out_shape=jax.ShapeDtypeStruct((B, S, D), x.dtype),
        grid_spec=pltpu.PrefetchScalarGridSpec(
            num_scalar_prefetch=0,
            grid=(B, S // TS, H // TH),
            in_specs=[
                pl.BlockSpec((None, TS, D), lambda b, si, hk: (b, si, 0)),   # h_res
                pl.BlockSpec((1, D), lambda b, si, hk: (0, 0)),              # mlp_scale
                pl.BlockSpec((D, TH), lambda b, si, hk: (0, hk)),            # w1 (bf16)
                pl.BlockSpec((D, TH), lambda b, si, hk: (0, hk)),            # w3 (bf16)
                pl.BlockSpec((TH, D), lambda b, si, hk: (hk, 0)),            # w2 (bf16)
            ],
            out_specs=pl.BlockSpec((None, TS, D), lambda b, si, hk: (b, si, 0)),
            scratch_shapes=[pltpu.VMEM((TS, D), jnp.float32)],
        ),
        compiler_params=cparams2(
            dimension_semantics=("parallel", "parallel", "arbitrary")),
    )(h_res, mlp_scale, w1_b, w3_b, w2_b)

    return out


# --------------------------- plain-JAX reference -------------------------------
def reference_layer(x, params, *, n_heads, head_dim):
    B, S, D = x.shape
    hd2 = head_dim // 2

    def rmsnorm(v, scale):
        ms = jnp.mean(v * v, axis=-1, keepdims=True)
        return v * jax.lax.rsqrt(ms + EPS) * scale

    xn = rmsnorm(x, params["sa_scale"])
    q = (xn @ params["wq"]).reshape(B, S, n_heads, head_dim)
    k = (xn @ params["wk"]).reshape(B, S, n_heads, head_dim)
    v = (xn @ params["wv"]).reshape(B, S, n_heads, head_dim)

    pos = jnp.arange(S, dtype=jnp.float32)
    theta = 1.0 / (10000.0 ** (jnp.arange(hd2, dtype=jnp.float32) * 2.0 / head_dim))
    ang = pos[:, None] * theta[None, :]
    cos = jnp.cos(ang)[None, :, None, :]
    sin = jnp.sin(ang)[None, :, None, :]

    def rope(t):  # torchtune-style interleaved pairs
        t = t.reshape(B, S, n_heads, hd2, 2)
        t0, t1 = t[..., 0], t[..., 1]
        r0 = t0 * cos - t1 * sin
        r1 = t1 * cos + t0 * sin
        return jnp.stack([r0, r1], axis=-1).reshape(B, S, n_heads, head_dim)

    q, k = rope(q), rope(k)
    q = q.transpose(0, 2, 1, 3)
    k = k.transpose(0, 2, 1, 3)
    vt = v.transpose(0, 2, 1, 3)
    s = jnp.einsum("bhqd,bhkd->bhqk", q, k) / math.sqrt(head_dim)
    mask = jnp.tril(jnp.ones((S, S), bool))
    s = jnp.where(mask, s, -jnp.inf)
    p = jax.nn.softmax(s, axis=-1)
    o = jnp.einsum("bhqk,bhkd->bhqd", p, vt).transpose(0, 2, 1, 3).reshape(B, S, D)
    h = x + o @ params["wo"]

    hn = rmsnorm(h, params["mlp_scale"])
    mlp_out = (jax.nn.silu(hn @ params["w1"]) * (hn @ params["w3"])) @ params["w2"]
    return h + mlp_out


# ------------------------------------ main --------------------------------------
if __name__ == "__main__":
    B, S, D = 2, 8, 32
    n_heads, head_dim = 4, D // 4
    H = 64  # MLP hidden dim

    key = jax.random.PRNGKey(0)
    ks = jax.random.split(key, 9)
    w = lambda kk, shp: (0.15 * jax.random.normal(kk, shp)).astype(jnp.float32)

    params = {
        "sa_scale": jnp.ones((D,), jnp.float32),
        "mlp_scale": jnp.ones((D,), jnp.float32),
        "wq": w(ks[0], (D, D)),
        "wk": w(ks[1], (D, D)),
        "wv": w(ks[2], (D, D)),
        "wo": w(ks[3], (D, D)),
        "w1": w(ks[4], (D, H)),
        "w3": w(ks[5], (D, H)),
        "w2": w(ks[6], (H, D)),
    }
    x = jax.random.normal(ks[7], (B, S, D), jnp.float32)

    out = transformer_decoder_layer(x, params, n_heads=n_heads, head_dim=head_dim)
    out = jax.block_until_ready(out)

    ref = jax.block_until_ready(
        reference_layer(x, params, n_heads=n_heads, head_dim=head_dim))

    max_err = float(jnp.max(jnp.abs(out - ref)))
    assert out.shape == (B, S, D)
    # bf16 MXU operands (f32 accumulation) vs. the all-f32 reference -> widened tolerance.
    assert max_err < 1e-1, f"mismatch vs reference: max abs err = {max_err}"
    print("KERNEL_OK")
</pallas_src>

<mosaic_0001>
module attributes {stable_mosaic.version = 11 : i64} {
  func.func @_qkv_rope_kernel(%arg0: i32, %arg1: i32, %arg2: memref<1x8x32xf32, #tpu.memory_space<vmem>>, %arg3: memref<8x4xf32, #tpu.memory_space<vmem>>, %arg4: memref<8x4xf32, #tpu.memory_space<vmem>>, %arg5: memref<1x32xf32, #tpu.memory_space<vmem>>, %arg6: memref<32x32xbf16, #tpu.memory_space<vmem>>, %arg7: memref<32x32xbf16, #tpu.memory_space<vmem>>, %arg8: memref<32x32xbf16, #tpu.memory_space<vmem>>, %arg9: memref<1x8x32xbf16, #tpu.memory_space<vmem>>, %arg10: memref<1x8x32xbf16, #tpu.memory_space<vmem>>, %arg11: memref<1x8x32xbf16, #tpu.memory_space<vmem>>) attributes {dimension_semantics = [#tpu.dimension_semantics<parallel>, #tpu.dimension_semantics<parallel>], iteration_bounds = array<i64: 2, 1>, scalar_prefetch = 0 : i64, scratch_operands = 0 : i64, tpu.core_type = #tpu.core_type<tc>, window_params = [{transform_indices = @transform_0, window_bounds = array<i64: 1, 8, 32>}, {transform_indices = @transform_1, window_bounds = array<i64: 8, 4>}, {transform_indices = @transform_2, window_bounds = array<i64: 8, 4>}, {pipeline_mode = #tpu.pipeline_mode<synchronous>, transform_indices = @transform_3, window_bounds = array<i64: 1, 32>}, {pipeline_mode = #tpu.pipeline_mode<synchronous>, transform_indices = @transform_4, window_bounds = array<i64: 32, 32>}, {pipeline_mode = #tpu.pipeline_mode<synchronous>, transform_indices = @transform_5, window_bounds = array<i64: 32, 32>}, {pipeline_mode = #tpu.pipeline_mode<synchronous>, transform_indices = @transform_6, window_bounds = array<i64: 32, 32>}, {transform_indices = @transform_7, window_bounds = array<i64: 1, 8, 32>}, {transform_indices = @transform_8, window_bounds = array<i64: 1, 8, 32>}, {transform_indices = @transform_9, window_bounds = array<i64: 1, 8, 32>}]} {
    %c0 = arith.constant 0 : index
    %c0_0 = arith.constant 0 : index
    %c0_1 = arith.constant 0 : index
    %0 = vector.load %arg2[%c0, %c0_0, %c0_1] : memref<1x8x32xf32, #tpu.memory_space<vmem>>, vector<1x8x32xf32>
    %1 = vector.shape_cast %0 : vector<1x8x32xf32> to vector<8x32xf32>
    %c0_2 = arith.constant 0 : index
    %c0_3 = arith.constant 0 : index
    %2 = vector.load %arg5[%c0_2, %c0_3] : memref<1x32xf32, #tpu.memory_space<vmem>>, vector<1x32xf32>
    %3 = arith.mulf %1, %1 : vector<8x32xf32>
    %cst = arith.constant dense<0.000000e+00> : vector<8xf32>
    %4 = vector.multi_reduction <add>, %3, %cst [1] : vector<8x32xf32> to vector<8xf32>
    %5 = vector.shape_cast %4 : vector<8xf32> to vector<8x1xf32>
    %cst_4 = arith.constant 3.200000e+01 : f32
    %6 = vector.broadcast %cst_4 : f32 to vector<8x1xf32>
    %7 = arith.divf %5, %6 : vector<8x1xf32>
    %cst_5 = arith.constant 9.99999997E-7 : f32
    %8 = vector.broadcast %cst_5 : f32 to vector<8x1xf32>
    %9 = arith.addf %7, %8 : vector<8x1xf32>
    %10 = math.rsqrt %9 : vector<8x1xf32>
    %11 = vector.broadcast %10 : vector<8x1xf32> to vector<8x32xf32>
    %12 = arith.mulf %1, %11 : vector<8x32xf32>
    %13 = vector.broadcast %2 : vector<1x32xf32> to vector<8x32xf32>
    %14 = arith.mulf %12, %13 : vector<8x32xf32>
    %15 = arith.truncf %14 : vector<8x32xf32> to vector<8x32xbf16>
    %c0_6 = arith.constant 0 : index
    %c0_7 = arith.constant 0 : index
    %16 = vector.load %arg6[%c0_6, %c0_7] : memref<32x32xbf16, #tpu.memory_space<vmem>>, vector<32x32xbf16>
    %cst_8 = arith.constant dense<0.000000e+00> : vector<8x32xf32>
    %17 = tpu.matmul %15, %16, %cst_8 {dimension_numbers = #tpu.dot_dimension_numbers<[1], [0], [0], [1], [0, 0, 1, 1], [], []>} : vector<8x32xbf16>, vector<32x32xbf16>, vector<8x32xf32> -> vector<8x32xf32>
    %c0_9 = arith.constant 0 : index
    %c0_10 = arith.constant 0 : index
    %18 = vector.load %arg7[%c0_9, %c0_10] : memref<32x32xbf16, #tpu.memory_space<vmem>>, vector<32x32xbf16>
    %cst_11 = arith.constant dense<0.000000e+00> : vector<8x32xf32>
    %19 = tpu.matmul %15, %18, %cst_11 {dimension_numbers = #tpu.dot_dimension_numbers<[1], [0], [0], [1], [0, 0, 1, 1], [], []>} : vector<8x32xbf16>, vector<32x32xbf16>, vector<8x32xf32> -> vector<8x32xf32>
    %c0_12 = arith.constant 0 : index
    %c0_13 = arith.constant 0 : index
    %20 = vector.load %arg8[%c0_12, %c0_13] : memref<32x32xbf16, #tpu.memory_space<vmem>>, vector<32x32xbf16>
    %cst_14 = arith.constant dense<0.000000e+00> : vector<8x32xf32>
    %21 = tpu.matmul %15, %20, %cst_14 {dimension_numbers = #tpu.dot_dimension_numbers<[1], [0], [0], [1], [0, 0, 1, 1], [], []>} : vector<8x32xbf16>, vector<32x32xbf16>, vector<8x32xf32> -> vector<8x32xf32>
    %c0_15 = arith.constant 0 : index
    %c0_16 = arith.constant 0 : index
    %22 = vector.load %arg3[%c0_15, %c0_16] : memref<8x4xf32, #tpu.memory_space<vmem>>, vector<8x4xf32>
    %c0_17 = arith.constant 0 : index
    %c0_18 = arith.constant 0 : index
    %23 = vector.load %arg4[%c0_17, %c0_18] : memref<8x4xf32, #tpu.memory_space<vmem>>, vector<8x4xf32>
    %24 = vector.extract_strided_slice %17 {offsets = [0, 0], sizes = [8, 4], strides = [1, 1]} : vector<8x32xf32> to vector<8x4xf32>
    %25 = vector.extract_strided_slice %17 {offsets = [0, 4], sizes = [8, 4], strides = [1, 1]} : vector<8x32xf32> to vector<8x4xf32>
    %26 = vector.extract_strided_slice %19 {offsets = [0, 0], sizes = [8, 4], strides = [1, 1]} : vector<8x32xf32> to vector<8x4xf32>
    %27 = vector.extract_strided_slice %19 {offsets = [0, 4], sizes = [8, 4], strides = [1, 1]} : vector<8x32xf32> to vector<8x4xf32>
    %28 = arith.mulf %24, %22 : vector<8x4xf32>
    %29 = arith.mulf %25, %23 : vector<8x4xf32>
    %30 = arith.subf %28, %29 : vector<8x4xf32>
    %31 = arith.mulf %25, %22 : vector<8x4xf32>
    %32 = arith.mulf %24, %23 : vector<8x4xf32>
    %33 = arith.addf %31, %32 : vector<8x4xf32>
    %34 = arith.mulf %26, %22 : vector<8x4xf32>
    %35 = arith.mulf %27, %23 : vector<8x4xf32>
    %36 = arith.subf %34, %35 : vector<8x4xf32>
    %37 = arith.mulf %27, %22 : vector<8x4xf32>
    %38 = arith.mulf %26, %23 : vector<8x4xf32>
    %39 = arith.addf %37, %38 : vector<8x4xf32>
    %40 = vector.extract_strided_slice %17 {offsets = [0, 8], sizes = [8, 4], strides = [1, 1]} : vector<8x32xf32> to vector<8x4xf32>
    %41 = vector.extract_strided_slice %17 {offsets = [0, 12], sizes = [8, 4], strides = [1, 1]} : vector<8x32xf32> to vector<8x4xf32>
    %42 = vector.extract_strided_slice %19 {offsets = [0, 8], sizes = [8, 4], strides = [1, 1]} : vector<8x32xf32> to vector<8x4xf32>
    %43 = vector.extract_strided_slice %19 {offsets = [0, 12], sizes = [8, 4], strides = [1, 1]} : vector<8x32xf32> to vector<8x4xf32>
    %44 = arith.mulf %40, %22 : vector<8x4xf32>
    %45 = arith.mulf %41, %23 : vector<8x4xf32>
    %46 = arith.subf %44, %45 : vector<8x4xf32>
    %47 = arith.mulf %41, %22 : vector<8x4xf32>
    %48 = arith.mulf %40, %23 : vector<8x4xf32>
    %49 = arith.addf %47, %48 : vector<8x4xf32>
    %50 = arith.mulf %42, %22 : vector<8x4xf32>
    %51 = arith.mulf %43, %23 : vector<8x4xf32>
    %52 = arith.subf %50, %51 : vector<8x4xf32>
    %53 = arith.mulf %43, %22 : vector<8x4xf32>
    %54 = arith.mulf %42, %23 : vector<8x4xf32>
    %55 = arith.addf %53, %54 : vector<8x4xf32>
    %56 = vector.extract_strided_slice %17 {offsets = [0, 16], sizes = [8, 4], strides = [1, 1]} : vector<8x32xf32> to vector<8x4xf32>
    %57 = vector.extract_strided_slice %17 {offsets = [0, 20], sizes = [8, 4], strides = [1, 1]} : vector<8x32xf32> to vector<8x4xf32>
    %58 = vector.extract_strided_slice %19 {offsets = [0, 16], sizes = [8, 4], strides = [1, 1]} : vector<8x32xf32> to vector<8x4xf32>
    %59 = vector.extract_strided_slice %19 {offsets = [0, 20], sizes = [8, 4], strides = [1, 1]} : vector<8x32xf32> to vector<8x4xf32>
    %60 = arith.mulf %56, %22 : vector<8x4xf32>
    %61 = arith.mulf %57, %23 : vector<8x4xf32>
    %62 = arith.subf %60, %61 : vector<8x4xf32>
    %63 = arith.mulf %57, %22 : vector<8x4xf32>
    %64 = arith.mulf %56, %23 : vector<8x4xf32>
    %65 = arith.addf %63, %64 : vector<8x4xf32>
    %66 = arith.mulf %58, %22 : vector<8x4xf32>
    %67 = arith.mulf %59, %23 : vector<8x4xf32>
    %68 = arith.subf %66, %67 : vector<8x4xf32>
    %69 = arith.mulf %59, %22 : vector<8x4xf32>
    %70 = arith.mulf %58, %23 : vector<8x4xf32>
    %71 = arith.addf %69, %70 : vector<8x4xf32>
    %72 = vector.extract_strided_slice %17 {offsets = [0, 24], sizes = [8, 4], strides = [1, 1]} : vector<8x32xf32> to vector<8x4xf32>
    %73 = vector.extract_strided_slice %17 {offsets = [0, 28], sizes = [8, 4], strides = [1, 1]} : vector<8x32xf32> to vector<8x4xf32>
    %74 = vector.extract_strided_slice %19 {offsets = [0, 24], sizes = [8, 4], strides = [1, 1]} : vector<8x32xf32> to vector<8x4xf32>
    %75 = vector.extract_strided_slice %19 {offsets = [0, 28], sizes = [8, 4], strides = [1, 1]} : vector<8x32xf32> to vector<8x4xf32>
    %76 = arith.mulf %72, %22 : vector<8x4xf32>
    %77 = arith.mulf %73, %23 : vector<8x4xf32>
    %78 = arith.subf %76, %77 : vector<8x4xf32>
    %79 = arith.mulf %73, %22 : vector<8x4xf32>
    %80 = arith.mulf %72, %23 : vector<8x4xf32>
    %81 = arith.addf %79, %80 : vector<8x4xf32>
    %82 = arith.mulf %74, %22 : vector<8x4xf32>
    %83 = arith.mulf %75, %23 : vector<8x4xf32>
    %84 = arith.subf %82, %83 : vector<8x4xf32>
    %85 = arith.mulf %75, %22 : vector<8x4xf32>
    %86 = arith.mulf %74, %23 : vector<8x4xf32>
    %87 = arith.addf %85, %86 : vector<8x4xf32>
    %88 = tpu.concatenate %30, %33, %46, %49, %62, %65, %78, %81 in 1 : vector<8x4xf32>, vector<8x4xf32>, vector<8x4xf32>, vector<8x4xf32>, vector<8x4xf32>, vector<8x4xf32>, vector<8x4xf32>, vector<8x4xf32> -> vector<8x32xf32>
    %89 = arith.truncf %88 : vector<8x32xf32> to vector<8x32xbf16>
    %c0_19 = arith.constant 0 : index
    %c0_20 = arith.constant 0 : index
    %c0_21 = arith.constant 0 : index
    %90 = vector.load %arg9[%c0_19, %c0_20, %c0_21] : memref<1x8x32xbf16, #tpu.memory_space<vmem>>, vector<1x8x32xbf16>
    %91 = vector.shape_cast %90 : vector<1x8x32xbf16> to vector<8x32xbf16>
    %92 = vector.shape_cast %89 : vector<8x32xbf16> to vector<1x8x32xbf16>
    tpu.vector_store %arg9[%c0_19, %c0_20, %c0_21], %92 {strides = array<i32>} : memref<1x8x32xbf16, #tpu.memory_space<vmem>>, vector<1x8x32xbf16>,
    %93 = tpu.concatenate %36, %39, %52, %55, %68, %71, %84, %87 in 1 : vector<8x4xf32>, vector<8x4xf32>, vector<8x4xf32>, vector<8x4xf32>, vector<8x4xf32>, vector<8x4xf32>, vector<8x4xf32>, vector<8x4xf32> -> vector<8x32xf32>
    %94 = arith.truncf %93 : vector<8x32xf32> to vector<8x32xbf16>
    %c0_22 = arith.constant 0 : index
    %c0_23 = arith.constant 0 : index
    %c0_24 = arith.constant 0 : index
    %95 = vector.load %arg10[%c0_22, %c0_23, %c0_24] : memref<1x8x32xbf16, #tpu.memory_space<vmem>>, vector<1x8x32xbf16>
    %96 = vector.shape_cast %95 : vector<1x8x32xbf16> to vector<8x32xbf16>
    %97 = vector.shape_cast %94 : vector<8x32xbf16> to vector<1x8x32xbf16>
    tpu.vector_store %arg10[%c0_22, %c0_23, %c0_24], %97 {strides = array<i32>} : memref<1x8x32xbf16, #tpu.memory_space<vmem>>, vector<1x8x32xbf16>,
    %98 = arith.truncf %21 : vector<8x32xf32> to vector<8x32xbf16>
    %c0_25 = arith.constant 0 : index
    %c0_26 = arith.constant 0 : index
    %c0_27 = arith.constant 0 : index
    %99 = vector.load %arg11[%c0_25, %c0_26, %c0_27] : memref<1x8x32xbf16, #tpu.memory_space<vmem>>, vector<1x8x32xbf16>
    %100 = vector.shape_cast %99 : vector<1x8x32xbf16> to vector<8x32xbf16>
    %101 = vector.shape_cast %98 : vector<8x32xbf16> to vector<1x8x32xbf16>
    tpu.vector_store %arg11[%c0_25, %c0_26, %c0_27], %101 {strides = array<i32>} : memref<1x8x32xbf16, #tpu.memory_space<vmem>>, vector<1x8x32xbf16>,
    return
  }
  func.func @transform_0(%arg0: i32, %arg1: i32) -> (i32, i32, i32) {
    %c0_i32 = arith.constant 0 : i32
    %c0_i32_0 = arith.constant 0 : i32
    return %arg0, %arg1, %c0_i32 : i32, i32, i32
  }
  func.func @transform_1(%arg0: i32, %arg1: i32) -> (i32, i32) {
    %c0_i32 = arith.constant 0 : i32
    %c0_i32_0 = arith.constant 0 : i32
    return %arg1, %c0_i32 : i32, i32
  }
  func.func @transform_2(%arg0: i32, %arg1: i32) -> (i32, i32) {
    %c0_i32 = arith.constant 0 : i32
    %c0_i32_0 = arith.constant 0 : i32
    return %arg1, %c0_i32 : i32, i32
  }
  func.func @transform_3(%arg0: i32, %arg1: i32) -> (i32, i32) {
    %c0_i32 = arith.constant 0 : i32
    %c0_i32_0 = arith.constant 0 : i32
    %c0_i32_1 = arith.constant 0 : i32
    return %c0_i32, %c0_i32_0 : i32, i32
  }
  func.func @transform_4(%arg0: i32, %arg1: i32) -> (i32, i32) {
    %c0_i32 = arith.constant 0 : i32
    %c0_i32_0 = arith.constant 0 : i32
    %c0_i32_1 = arith.constant 0 : i32
    return %c0_i32, %c0_i32_0 : i32, i32
  }
  func.func @transform_5(%arg0: i32, %arg1: i32) -> (i32, i32) {
    %c0_i32 = arith.constant 0 : i32
    %c0_i32_0 = arith.constant 0 : i32
    %c0_i32_1 = arith.constant 0 : i32
    return %c0_i32, %c0_i32_0 : i32, i32
  }
  func.func @transform_6(%arg0: i32, %arg1: i32) -> (i32, i32) {
    %c0_i32 = arith.constant 0 : i32
    %c0_i32_0 = arith.constant 0 : i32
    %c0_i32_1 = arith.constant 0 : i32
    return %c0_i32, %c0_i32_0 : i32, i32
  }
  func.func @transform_7(%arg0: i32, %arg1: i32) -> (i32, i32, i32) {
    %c0_i32 = arith.constant 0 : i32
    %c0_i32_0 = arith.constant 0 : i32
    return %arg0, %arg1, %c0_i32 : i32, i32, i32
  }
  func.func @transform_8(%arg0: i32, %arg1: i32) -> (i32, i32, i32) {
    %c0_i32 = arith.constant 0 : i32
    %c0_i32_0 = arith.constant 0 : i32
    return %arg0, %arg1, %c0_i32 : i32, i32, i32
  }
  func.func @transform_9(%arg0: i32, %arg1: i32) -> (i32, i32, i32) {
    %c0_i32 = arith.constant 0 : i32
    %c0_i32_0 = arith.constant 0 : i32
    return %arg0, %arg1, %c0_i32 : i32, i32, i32
  }
}

</mosaic_0001>

<llo_original>
// kernel: tpu_custom_call.1
$region0: #{tpu_custom_call.1}
  #allocation0 [shape = 'u32[]', space=smem, size = 0x4, offset = 0x4, fixed_abs, tag = 'smem constant byte address 0x4 - core index']
  #allocation1 [shape = 'u32[144,128]{1,0:T(1,128)}', space=vmem, size = 0x12000, scoped, tag = 'internal scratch']
  %s0 = inlined_call_operand.vmem [shape: f32[2,8,32], index: 0, kind: input, shape index: {}]
  %s1 = inlined_call_operand.vmem [shape: f32[8,4], index: 1, kind: input, shape index: {}]
  %s2 = inlined_call_operand.vmem [shape: f32[8,4], index: 2, kind: input, shape index: {}]
  %s3 = inlined_call_operand.vmem [shape: f32[1,32], index: 3, kind: input, shape index: {}]
  %s4 = inlined_call_operand.vmem [shape: bf16[32,32], index: 4, kind: input, shape index: {}]
  %s5 = inlined_call_operand.hbm [shape: bf16[32,32], index: 5, kind: input, shape index: {}]
  %s6 = inlined_call_operand.hbm [shape: bf16[32,32], index: 6, kind: input, shape index: {}]
  %s7 = inlined_call_operand.hbm [shape: bf16[2,8,32], index: 7, kind: output, shape index: {0}]
  %s8 = inlined_call_operand.hbm [shape: bf16[2,8,32], index: 8, kind: output, shape index: {1}]
  %s9 = inlined_call_operand.hbm [shape: bf16[2,8,32], index: 9, kind: output, shape index: {2}]
  %10 = xla_tuple %s7, %s8, %s9
  %s11 = sld [smem:[#allocation0]]
  $region85: #{tpu_custom_call.1} parent=0
    _
  %s13 = ssub.s32 1, %s11
  %s14 = scalar_select 0, %s13, %s11
  $region1: #{tpu_custom_call.1} parent=0
    #allocation2 [shape = 'u8[8192]{0}', space=vmem, size = 0x2000, scoped, tag = 'input window, operand 5, single buffered']
    #allocation3 [shape = 's32[2]{0}', space=sflag, size = 0x8, scoped, tag = 'scoped memory for tpu_custom_call.1']
    #allocation4 [shape = 's32[2]{0}', space=sflag, size = 0x8, scoped, tag = 'scoped memory for tpu_custom_call.1']
    #allocation5 [shape = 'u8[8192]{0}', space=vmem, size = 0x2000, scoped, tag = 'input window, operand 6, single buffered']
    #allocation6 [shape = 's32[1]{0}', space=sflag, size = 0x4, scoped, tag = 'scoped memory for tpu_custom_call.1']
    #allocation7 [shape = 'u8[4096]{0}', space=vmem, size = 0x1000, scoped, tag = 'output window, operand 0']
    #allocation8 [shape = 'u8[4096]{0}', space=vmem, size = 0x1000, scoped, tag = 'output window, operand 1']
    #allocation9 [shape = 's32[2]{0}', space=sflag, size = 0x8, scoped, tag = 'scoped memory for tpu_custom_call.1']
    #allocation10 [shape = 'u8[4096]{0}', space=vmem, size = 0x1000, scoped, tag = 'output window, operand 2']
    %15 = vsyncpa [#allocation3], 0
    %16 = vsyncpa [#allocation6], 0
    %17 = vsyncpa [#allocation4], 0
    %s18 = scalar_lea.sflag [#allocation4], 1
    %19 = vsyncpa %s18, 0
    %20 = vsyncpa [#allocation9], 0
    %s21 = scalar_lea.sflag [#allocation9], 1
    %22 = vsyncpa %s21, 0
    loop: start=0, step=1, limit=4
    $region2: #{tpu_custom_call.1} parent=1 // loop_pre_header
      _
    $region3: #{tpu_custom_call.1} parent=1 // loop_header
      %s24 = sphi 0, %s28
      %p25 = scmp.ge.s32.totalorder %s24, 4
      %s31 = sphi 0, %s43
      %s32 = sphi 0, %s39
      %s33 = sphi 0, %s31
      %s34 = sphi 0, %s32
      %s35 = sphi 0, %s33
      %s36 = sphi 0, %s34
      %s48 = sphi 0, %s50
      %s51 = sphi 0, %s48
      %s52 = sphi 0, %s51
      %s68 = sphi 0, %s52
      %s74 = sphi 0, %s76
      %s77 = sphi 0, %s74
      %s78 = sphi 0, %s77
      %s94 = sphi 0, %s78
      %s100 = sphi 0, %s102
      %s103 = sphi 0, %s100
      %s104 = sphi 0, %s103
      %s120 = sphi 0, %s104
      %s124 = sphi 0, %s124
      %s126 = sphi 0, %s124
      %s127 = sphi 0, %s126
      %s141 = sphi 0, %s127
      %s145 = sphi 0, %s145
      %s147 = sphi 0, %s145
      %s148 = sphi 0, %s147
      %s162 = sphi 0, %s148
      %s166 = sphi 0, %s166
      %s168 = sphi 0, %s166
      %s169 = sphi 0, %s168
      %s183 = sphi 0, %s169
      %s187 = sphi 0, %s187
      %s189 = sphi 0, %s187
      %s190 = sphi 0, %s189
      %s204 = sphi 0, %s190
      %s212 = sphi 0, %s214
      %s215 = sphi 0, %s212
      %s216 = sphi 0, %s215
      %s232 = sphi 0, %s216
      %s240 = sphi 0, %s242
      %s243 = sphi 0, %s240
      %s244 = sphi 0, %s243
      %s260 = sphi 0, %s244
      %s268 = sphi 0, %s270
      %s271 = sphi 0, %s268
      %s272 = sphi 0, %s271
      %s288 = sphi 0, %s272
    $region4: #{tpu_custom_call.1} parent=1 // loop_header_branch
      %27 = sbr.rel (%p25) target = $region8
    $region5: #{tpu_custom_call.1} parent=1 // loop_body
      %s29 = ssub.s32 %s24, 1
      %s30 = ssub.s32 %s24, 2
      %s37 = sadd.s32 1, %s32
      %p38 = scmp.ge.s32.totalorder %s37, 1
      %s39 = scalar_select %p38, 0, %s37
      %s40 = sadd.s32 1, %s31
      %s41 = scalar_select %p38, %s40, %s31
      %p42 = scmp.ge.s32.totalorder %s41, 2
      %s43 = scalar_select %p42, 0, %s41
      %s44 = ssub.s32 %s31, %s43
      %s45 = ssub.s32 %s32, %s39
      %s46 = sor.u32 %s44, %s45
      %p47 = scmp.eq.s32.totalorder %s46, 0
      %s49 = sadd.s32 %s48, 1
      %s50 = scalar_select %p47, %s48, %s49
      %p53 = pneg %p47
      %p54 = scmp.eq.s32.totalorder %s24, 1
      %p55 = por %p53, %p54
      %p56 = scmp.ne.s32.totalorder %s48, %s51
      %p57 = scmp.eq.s32.totalorder %s24, 0
      %p58 = por %p56, %p57
      %p59 = scmp.ne.s32.totalorder %s48, %s51
      %p60 = scmp.eq.s32.totalorder %s29, 1
      %p61 = por %p59, %p60
      %p62 = scmp.ne.s32.totalorder %s51, %s52
      %p63 = scmp.eq.s32.totalorder %s29, 0
      %p64 = por %p62, %p63
      %p65 = scmp.ne.s32.totalorder %s51, %s52
      %p66 = scmp.eq.s32.totalorder %s30, 1
      %p67 = por %p65, %p66
      %p69 = scmp.ne.s32.totalorder %s52, %s68
      %p70 = scmp.eq.s32.totalorder %s30, 0
      %p71 = por %p69, %p70
      %s72 = ssub.s32 %s32, %s39
      %p73 = scmp.eq.s32.totalorder %s72, 0
      %s75 = sadd.s32 %s74, 1
      %s76 = scalar_select %p73, %s74, %s75
      %p79 = pneg %p73
      %p80 = scmp.eq.s32.totalorder %s24, 1
      %p81 = por %p79, %p80
      %p82 = scmp.ne.s32.totalorder %s74, %s77
      %p83 = scmp.eq.s32.totalorder %s24, 0
      %p84 = por %p82, %p83
      %p85 = scmp.ne.s32.totalorder %s74, %s77
      %p86 = scmp.eq.s32.totalorder %s29, 1
      %p87 = por %p85, %p86
      %p88 = scmp.ne.s32.totalorder %s77, %s78
      %p89 = scmp.eq.s32.totalorder %s29, 0
      %p90 = por %p88, %p89
      %p91 = scmp.ne.s32.totalorder %s77, %s78
      %p92 = scmp.eq.s32.totalorder %s30, 1
      %p93 = por %p91, %p92
      %p95 = scmp.ne.s32.totalorder %s78, %s94
      %p96 = scmp.eq.s32.totalorder %s30, 0
      %p97 = por %p95, %p96
      %s98 = ssub.s32 %s32, %s39
      %p99 = scmp.eq.s32.totalorder %s98, 0
      %s101 = sadd.s32 %s100, 1
      %s102 = scalar_select %p99, %s100, %s101
      %p105 = pneg %p99
      %p106 = scmp.eq.s32.totalorder %s24, 1
      %p107 = por %p105, %p106
      %p108 = scmp.ne.s32.totalorder %s100, %s103
      %p109 = scmp.eq.s32.totalorder %s24, 0
      %p110 = por %p108, %p109
      %p111 = scmp.ne.s32.totalorder %s100, %s103
      %p112 = scmp.eq.s32.totalorder %s29, 1
      %p113 = por %p111, %p112
      %p114 = scmp.ne.s32.totalorder %s103, %s104
      %p115 = scmp.eq.s32.totalorder %s29, 0
      %p116 = por %p114, %p115
      %p117 = scmp.ne.s32.totalorder %s103, %s104
      %p118 = scmp.eq.s32.totalorder %s30, 1
      %p119 = por %p117, %p118
      %p121 = scmp.ne.s32.totalorder %s104, %s120
      %p122 = scmp.eq.s32.totalorder %s30, 0
      %p123 = por %p121, %p122
      %s125 = sadd.s32 %s124, 1
      %p128 = scmp.eq.s32.totalorder %s24, 1
      %p129 = scmp.ne.s32.totalorder %s124, %s126
      %p130 = scmp.eq.s32.totalorder %s24, 0
      %p131 = por %p129, %p130
      %p132 = scmp.ne.s32.totalorder %s124, %s126
      %p133 = scmp.eq.s32.totalorder %s29, 1
      %p134 = por %p132, %p133
      %p135 = scmp.ne.s32.totalorder %s126, %s127
      %p136 = scmp.eq.s32.totalorder %s29, 0
      %p137 = por %p135, %p136
      %p138 = scmp.ne.s32.totalorder %s126, %s127
      %p139 = scmp.eq.s32.totalorder %s30, 1
      %p140 = por %p138, %p139
      %p142 = scmp.ne.s32.totalorder %s127, %s141
      %p143 = scmp.eq.s32.totalorder %s30, 0
      %p144 = por %p142, %p143
      %s146 = sadd.s32 %s145, 1
      %p149 = scmp.eq.s32.totalorder %s24, 1
      %p150 = scmp.ne.s32.totalorder %s145, %s147
      %p151 = scmp.eq.s32.totalorder %s24, 0
      %p152 = por %p150, %p151
      %p153 = scmp.ne.s32.totalorder %s145, %s147
      %p154 = scmp.eq.s32.totalorder %s29, 1
      %p155 = por %p153, %p154
      %p156 = scmp.ne.s32.totalorder %s147, %s148
      %p157 = scmp.eq.s32.totalorder %s29, 0
      %p158 = por %p156, %p157
      %p159 = scmp.ne.s32.totalorder %s147, %s148
      %p160 = scmp.eq.s32.totalorder %s30, 1
      %p161 = por %p159, %p160
      %p163 = scmp.ne.s32.totalorder %s148, %s162
      %p164 = scmp.eq.s32.totalorder %s30, 0
      %p165 = por %p163, %p164
      %s167 = sadd.s32 %s166, 1
      %p170 = scmp.eq.s32.totalorder %s24, 1
      %p171 = scmp.ne.s32.totalorder %s166, %s168
      %p172 = scmp.eq.s32.totalorder %s24, 0
      %p173 = por %p171, %p172
      %p174 = scmp.ne.s32.totalorder %s166, %s168
      %p175 = scmp.eq.s32.totalorder %s29, 1
      %p176 = por %p174, %p175
      %p177 = scmp.ne.s32.totalorder %s168, %s169
      %p178 = scmp.eq.s32.totalorder %s29, 0
      %p179 = por %p177, %p178
      %p180 = scmp.ne.s32.totalorder %s168, %s169
      %p181 = scmp.eq.s32.totalorder %s30, 1
      %p182 = por %p180, %p181
      %p184 = scmp.ne.s32.totalorder %s169, %s183
      %p185 = scmp.eq.s32.totalorder %s30, 0
      %p186 = por %p184, %p185
      %s188 = sadd.s32 %s187, 1
      %p191 = scmp.eq.s32.totalorder %s24, 1
      %p192 = scmp.ne.s32.totalorder %s187, %s189
      %p193 = scmp.eq.s32.totalorder %s24, 0
      %p194 = por %p192, %p193
      %p195 = scmp.ne.s32.totalorder %s187, %s189
      %p196 = scmp.eq.s32.totalorder %s29, 1
      %p197 = por %p195, %p196
      %p198 = scmp.ne.s32.totalorder %s189, %s190
      %p199 = scmp.eq.s32.totalorder %s29, 0
      %p200 = por %p198, %p199
      %p201 = scmp.ne.s32.totalorder %s189, %s190
      %p202 = scmp.eq.s32.totalorder %s30, 1
      %p203 = por %p201, %p202
      %p205 = scmp.ne.s32.totalorder %s190, %s204
      %p206 = scmp.eq.s32.totalorder %s30, 0
      %p207 = por %p205, %p206
      %s208 = ssub.s32 %s31, %s43
      %s209 = ssub.s32 %s32, %s39
      %s210 = sor.u32 %s208, %s209
      %p211 = scmp.eq.s32.totalorder %s210, 0
      %s213 = sadd.s32 %s212, 1
      %s214 = scalar_select %p211, %s212, %s213
      %p217 = pneg %p211
      %p218 = scmp.eq.s32.totalorder %s24, 1
      %p219 = por %p217, %p218
      %p220 = scmp.ne.s32.totalorder %s212, %s215
      %p221 = scmp.eq.s32.totalorder %s24, 0
      %p222 = por %p220, %p221
      %p223 = scmp.ne.s32.totalorder %s212, %s215
      %p224 = scmp.eq.s32.totalorder %s29, 1
      %p225 = por %p223, %p224
      %p226 = scmp.ne.s32.totalorder %s215, %s216
      %p227 = scmp.eq.s32.totalorder %s29, 0
      %p228 = por %p226, %p227
      %p229 = scmp.ne.s32.totalorder %s215, %s216
      %p230 = scmp.eq.s32.totalorder %s30, 1
      %p231 = por %p229, %p230
      %p233 = scmp.ne.s32.totalorder %s216, %s232
      %p234 = scmp.eq.s32.totalorder %s30, 0
      %p235 = por %p233, %p234
      %s236 = ssub.s32 %s31, %s43
      %s237 = ssub.s32 %s32, %s39
      %s238 = sor.u32 %s236, %s237
      %p239 = scmp.eq.s32.totalorder %s238, 0
      %s241 = sadd.s32 %s240, 1
      %s242 = scalar_select %p239, %s240, %s241
      %p245 = pneg %p239
      %p246 = scmp.eq.s32.totalorder %s24, 1
      %p247 = por %p245, %p246
      %p248 = scmp.ne.s32.totalorder %s240, %s243
      %p249 = scmp.eq.s32.totalorder %s24, 0
      %p250 = por %p248, %p249
      %p251 = scmp.ne.s32.totalorder %s240, %s243
      %p252 = scmp.eq.s32.totalorder %s29, 1
      %p253 = por %p251, %p252
      %p254 = scmp.ne.s32.totalorder %s243, %s244
      %p255 = scmp.eq.s32.totalorder %s29, 0
      %p256 = por %p254, %p255
      %p257 = scmp.ne.s32.totalorder %s243, %s244
      %p258 = scmp.eq.s32.totalorder %s30, 1
      %p259 = por %p257, %p258
      %p261 = scmp.ne.s32.totalorder %s244, %s260
      %p262 = scmp.eq.s32.totalorder %s30, 0
      %p263 = por %p261, %p262
      %s264 = ssub.s32 %s31, %s43
      %s265 = ssub.s32 %s32, %s39
      %s266 = sor.u32 %s264, %s265
      %p267 = scmp.eq.s32.totalorder %s266, 0
      %s269 = sadd.s32 %s268, 1
      %s270 = scalar_select %p267, %s268, %s269
      %p273 = pneg %p267
      %p274 = scmp.eq.s32.totalorder %s24, 1
      %p275 = por %p273, %p274
      %p276 = scmp.ne.s32.totalorder %s268, %s271
      %p277 = scmp.eq.s32.totalorder %s24, 0
      %p278 = por %p276, %p277
      %p279 = scmp.ne.s32.totalorder %s268, %s271
      %p280 = scmp.eq.s32.totalorder %s29, 1
      %p281 = por %p279, %p280
      %p282 = scmp.ne.s32.totalorder %s271, %s272
      %p283 = scmp.eq.s32.totalorder %s29, 0
      %p284 = por %p282, %p283
      %p285 = scmp.ne.s32.totalorder %s271, %s272
      %p286 = scmp.eq.s32.totalorder %s30, 1
      %p287 = por %p285, %p286
      %p289 = scmp.ne.s32.totalorder %s272, %s288
      %p290 = scmp.eq.s32.totalorder %s30, 0
      %p291 = por %p289, %p290
      %p292 = scmp.le.s32.totalorder 1, %s24
      %p293 = scmp.lt.s32.totalorder %s24, 3
      %p294 = pnand %p292, %p293
      %p295 = pneg %p294
      // Predicated region
      $region9: #{tpu_custom_call.1} parent=5 // pred_check
        _
      $region10: #{tpu_custom_call.1} parent=5 // pred_check_branch
        %297 = sbr.rel (%p294) target = $region12
      $region11: #{tpu_custom_call.1} parent=5 // pred_region
        %s298 = ssub.s32 %s24, 1
        // Predicated region
        $region13: #{tpu_custom_call.1} parent=11 // pred_check
          %p299 = pneg %p90
        $region14: #{tpu_custom_call.1} parent=11 // pred_check_branch
          %301 = sbr.rel (%p299) target = $region16
        $region15: #{tpu_custom_call.1} parent=11 // pred_region
          %p302 = scmp.lt.s32.totalorder %s34, 0
          %s303 = scalar_select %p302, %s34, 0
          %s304 = smul.addr %s303, 8
          %s305 = scalar_lea.vmem %s1, %s304
        $region16: #{tpu_custom_call.1} parent=11 // pred_fallthru
          _
        // Predicated region
        $region17: #{tpu_custom_call.1} parent=11 // pred_check
          %p306 = pneg %p116
        $region18: #{tpu_custom_call.1} parent=11 // pred_check_branch
          %308 = sbr.rel (%p306) target = $region20
        $region19: #{tpu_custom_call.1} parent=11 // pred_region
          %p309 = scmp.lt.s32.totalorder %s34, 0
          %s310 = scalar_select %p309, %s34, 0
          %s311 = smul.addr %s310, 8
          %s312 = scalar_lea.vmem %s2, %s311
        $region20: #{tpu_custom_call.1} parent=11 // pred_fallthru
          _
        // Predicated region
        $region21: #{tpu_custom_call.1} parent=11 // pred_check
          %p313 = pneg %p137
        $region22: #{tpu_custom_call.1} parent=11 // pred_check_branch
          %315 = sbr.rel (%p313) target = $region24
        $region23: #{tpu_custom_call.1} parent=11 // pred_region
          _
        $region24: #{tpu_custom_call.1} parent=11 // pred_fallthru
          _
        // Predicated region
        $region25: #{tpu_custom_call.1} parent=11 // pred_check
          %p316 = pneg %p158
        $region26: #{tpu_custom_call.1} parent=11 // pred_check_branch
          %318 = sbr.rel (%p316) target = $region28
        $region27: #{tpu_custom_call.1} parent=11 // pred_region
          _
        $region28: #{tpu_custom_call.1} parent=11 // pred_fallthru
          _
        // Predicated region
        $region29: #{tpu_custom_call.1} parent=11 // pred_check
          %p319 = pneg %p179
        $region30: #{tpu_custom_call.1} parent=11 // pred_check_branch
          %321 = sbr.rel (%p319) target = $region32
        $region31: #{tpu_custom_call.1} parent=11 // pred_region
          %s323 = ssub.s32 256, 256
          %324 = vsyncadd [#allocation3], %s323
          %s325 = sshll.u32 [#allocation2], 4
          %s326 = int_to_ptr.vmem [resolvable:$true] %s325
          %331 = dma.hbm_to_vmem [thread:$0]  %s5, 256, %s326, [#allocation3], 64, 64, 4
        $region32: #{tpu_custom_call.1} parent=11 // pred_fallthru
          _
        // Predicated region
        $region33: #{tpu_custom_call.1} parent=11 // pred_check
          %p332 = pneg %p200
        $region34: #{tpu_custom_call.1} parent=11 // pred_check_branch
          %334 = sbr.rel (%p332) target = $region36
        $region35: #{tpu_custom_call.1} parent=11 // pred_region
          %s336 = ssub.s32 256, 256
          %337 = vsyncadd [#allocation6], %s336
          %s338 = sshll.u32 [#allocation5], 4
          %s339 = int_to_ptr.vmem [resolvable:$true] %s338
          %344 = dma.hbm_to_vmem [thread:$0]  %s6, 256, %s339, [#allocation6], 64, 64, 4
        $region36: #{tpu_custom_call.1} parent=11 // pred_fallthru
          _
      $region12: #{tpu_custom_call.1} parent=5 // pred_fallthru
        _
      %p345 = scmp.lt.s32.totalorder %s24, 2
      // Predicated region
      $region37: #{tpu_custom_call.1} parent=5 // pred_check
        %p346 = pneg %p345
      $region38: #{tpu_custom_call.1} parent=5 // pred_check_branch
        %348 = sbr.rel (%p346) target = $region40
      $region39: #{tpu_custom_call.1} parent=5 // pred_region
        // Predicated region
        $region41: #{tpu_custom_call.1} parent=39 // pred_check
          %p349 = pneg %p58
        $region42: #{tpu_custom_call.1} parent=39 // pred_check_branch
          %351 = sbr.rel (%p349) target = $region44
        $region43: #{tpu_custom_call.1} parent=39 // pred_region
          %p352 = scmp.lt.s32.totalorder %s31, 1
          %s353 = scalar_select %p352, %s31, 1
          %p354 = scmp.lt.s32.totalorder %s32, 0
          %s355 = scalar_select %p354, %s32, 0
          %s356 = sadd.s32 %s355, %s353
          %s357 = smul.addr %s356, 8
          %s358 = scalar_lea.vmem %s0, %s357
        $region44: #{tpu_custom_call.1} parent=39 // pred_fallthru
          _
      $region40: #{tpu_custom_call.1} parent=5 // pred_fallthru
        _
      %p359 = scmp.le.s32.totalorder 1, %s24
      %p360 = scmp.lt.s32.totalorder %s24, 3
      %p361 = pnand %p359, %p360
      %p362 = pneg %p361
      // Predicated region
      $region45: #{tpu_custom_call.1} parent=5 // pred_check
        _
      $region46: #{tpu_custom_call.1} parent=5 // pred_check_branch
        %364 = sbr.rel (%p361) target = $region48
      $region47: #{tpu_custom_call.1} parent=5 // pred_region
        %s365 = ssub.s32 %s24, 1
        // Predicated region
        $region49: #{tpu_custom_call.1} parent=47 // pred_check
          %p366 = pneg %p179
        $region50: #{tpu_custom_call.1} parent=47 // pred_check_branch
          %368 = sbr.rel (%p366) target = $region52
        $region51: #{tpu_custom_call.1} parent=47 // pred_region
          %369 = dma.done [#allocation3], 256
        $region52: #{tpu_custom_call.1} parent=47 // pred_fallthru
          _
        // Predicated region
        $region53: #{tpu_custom_call.1} parent=47 // pred_check
          %p370 = pneg %p200
        $region54: #{tpu_custom_call.1} parent=47 // pred_check_branch
          %372 = sbr.rel (%p370) target = $region56
        $region55: #{tpu_custom_call.1} parent=47 // pred_region
          %373 = dma.done [#allocation6], 256
        $region56: #{tpu_custom_call.1} parent=47 // pred_fallthru
          _
        %p374 = scmp.lt.s32.totalorder %s33, 1
        %s375 = scalar_select %p374, %s33, 1
        %p376 = scmp.lt.s32.totalorder %s34, 0
        %s377 = scalar_select %p376, %s34, 0
        %s378 = sadd.s32 %s377, %s375
        %s379 = smul.addr %s378, 8
        %s380 = scalar_lea.vmem %s0, %s379
        %p381 = pneg %p64
        %p382 = pneg %p61
        %p383 = scmp.lt.s32.totalorder %s34, 0
        %s384 = scalar_select %p383, %s34, 0
        %s385 = smul.addr %s384, 8
        %s386 = scalar_lea.vmem %s1, %s385
        %p387 = pneg %p90
        %p388 = pneg %p87
        %p389 = scmp.lt.s32.totalorder %s34, 0
        %s390 = scalar_select %p389, %s34, 0
        %s391 = smul.addr %s390, 8
        %s392 = scalar_lea.vmem %s2, %s391
        %p393 = pneg %p116
        %p394 = pneg %p113
        %p395 = pneg %p137
        %p396 = pneg %p134
        %p397 = pneg %p158
        %p398 = pneg %p155
        %p399 = pneg %p179
        %p400 = pneg %p176
        %p401 = pneg %p200
        %p402 = pneg %p197
        %p403 = pneg %p228
        %p404 = pneg %p225
        %s405 = sand.u32 %s215, 1
        %s406 = scalar_lea.sflag [#allocation4], %s405
        %s407 = sand.u32 %s215, 1
        %s408 = smul.addr %s407, 4
        %s409 = scalar_lea.vmem [#allocation7], %s408
        %p410 = pneg %p256
        %p411 = pneg %p253
        %s412 = sand.u32 %s29, 1
        %s413 = scalar_lea.sflag [#allocation9], %s412
        %s414 = sand.u32 %s243, 1
        %s415 = smul.addr %s414, 4
        %s416 = scalar_lea.vmem [#allocation8], %s415
        %p417 = pneg %p284
        %p418 = pneg %p281
        %s419 = sand.u32 %s29, 1
        %s420 = scalar_lea.sflag [#allocation9], %s419
        %s421 = sand.u32 %s271, 1
        %s422 = smul.addr %s421, 4
        %s423 = scalar_lea.vmem [#allocation10], %s422
        %p424 = scmp.lt.s32.totalorder %s33, 1
        %s425 = scalar_select %p424, %s33, 1
        %p426 = scmp.lt.s32.totalorder %s34, 0
        %s427 = scalar_select %p426, %s34, 0
        %s428 = sadd.s32 %s427, %s425
        %s429 = smul.addr %s428, 8
        %s430 = scalar_lea.vmem %s0, %s429
        %p431 = scmp.lt.s32.totalorder %s34, 0
        %s432 = scalar_select %p431, %s34, 0
        %s433 = smul.addr %s432, 8
        %s434 = scalar_lea.vmem %s1, %s433
        %p435 = scmp.lt.s32.totalorder %s34, 0
        %s436 = scalar_select %p435, %s34, 0
        %s437 = smul.addr %s436, 8
        %s438 = scalar_lea.vmem %s2, %s437
        %v440 = vld [vmem:[%s430] sm:$0xff]
        %v441 = vld [vmem:[%s3] sm:$0x1]
        %v442 = vmul.f32 %v440, %v440
        %vm443 = vcmask 261120
        %v444 = vsel %vm443, %v442, 0.0
        %445 = vadd.xlane.f32.xlu0 %v444
        %v446 = vpop.xlane.xlu0 %445
        %v447 = vrcp.pop 32.0
        %v448 = vmul.f32 %v446, %v447
        %v449 = vadd.f32 %v448, 1e-06
        %v450 = vrsqrt.pop %v449
        %v451 = vmul.f32 %v440, %v450
        %v453 = vlaneseq
        %v454 = vshrl.u32 %v453, 7
        %v455 = vsub.s32 0, %v454
        %v456 = vrot.slane %v441, %v455
        %v458 = vmul.f32 %v451, %v456
        %v459 = vpack.c.bf16 %v458, %v458
        %v460 = vld [vmem:[%s4] sm:$0xf]
        %v461 = vld [vmem:[%s4 + $0x4] sm:$0xf]
        %v462 = vld [vmem:[%s4 + $0x8] sm:$0xf]
        %v463 = vld [vmem:[%s4 + $0xc] sm:$0xf]
        %v468 = vunpack.c.l.b16 %v460
        %v469 = vunpack.c.l.b16 %v461
        %v470 = vunpack.c.l.b16 %v462
        %v471 = vunpack.c.l.b16 %v463
        %v472 = vpack.c.b16 %v469, %v468
        %v473 = vpack.c.b16 %v471, %v470
        %v477 = vsel %vm443, %v459, 0
        %479 = vmatprep.subr.bf16.mxu0 0
        %480 = vmatpush1.bf16.msra.mxu0 %v472
        %481 = vmatprep.subr.bf16.mxu0 0
        %482 = vmatpush1.bf16.msra.mxu0 %v473
        %483 = vmatprep.subr.bf16.mxu0 0
        %484 = vmatpush1.bf16.msra.mxu0 0
        %485 = vmatprep.subr.bf16.mxu0 0
        %486 = vmatpush1.bf16.msra.mxu0 0
        %487 = vmatprep.subr.bf16.mxu0 0
        %488 = vmatpush1.bf16.msra.mxu0 0
        %489 = vmatprep.subr.bf16.mxu0 0
        %490 = vmatpush1.bf16.msra.mxu0 0
        %491 = vmatprep.subr.bf16.mxu0 0
        %492 = vmatpush1.bf16.msra.mxu0 0
        %493 = vmatprep.subr.bf16.mxu0 0
        %494 = vmatpush1.bf16.msra.mxu0 0
        %495 = vmatprep.subr.bf16.mxu0 0
        %496 = vmatpush1.bf16.msra.mxu0 0
        %497 = vmatprep.subr.bf16.mxu0 0
        %498 = vmatpush1.bf16.msra.mxu0 0
        %499 = vmatprep.subr.bf16.mxu0 0
        %500 = vmatpush1.bf16.msra.mxu0 0
        %501 = vmatprep.subr.bf16.mxu0 0
        %502 = vmatpush1.bf16.msra.mxu0 0
        %503 = vmatprep.subr.bf16.mxu0 0
        %504 = vmatpush1.bf16.msra.mxu0 0
        %505 = vmatprep.subr.bf16.mxu0 0
        %506 = vmatpush1.bf16.msra.mxu0 0
        %507 = vmatprep.subr.bf16.mxu0 0
        %508 = vmatpush1.bf16.msra.mxu0 0
        %509 = vmatprep.subr.bf16.mxu0 0
        %510 = vmatpush1.bf16.msra.mxu0 0
        %511 = vmatprep.mubr.bf16.mxu0 0
        %512 = vmatmul.mubr.bf16.gmra.mrb[0].mxu0 %v477
        %v513 = vpop.f32.mrb[0].mxu0
        %v514 = vadd.f32 0.0, %v513
        %v515 = vpop.f32.mrb[0].mxu0
        %v516 = vpop.f32.mrb[0].mxu0
        %v517 = vpop.f32.mrb[0].mxu0
        %518 = vdwg.mxu0
        %v519 = vld [vmem:[#allocation2] sm:$0xf]
        %v520 = vld [vmem:[#allocation2 + $0x4] sm:$0xf]
        %v521 = vld [vmem:[#allocation2 + $0x8] sm:$0xf]
        %v522 = vld [vmem:[#allocation2 + $0xc] sm:$0xf]
        %v527 = vunpack.c.l.b16 %v519
        %v528 = vunpack.c.l.b16 %v520
        %v529 = vunpack.c.l.b16 %v521
        %v530 = vunpack.c.l.b16 %v522
        %v531 = vpack.c.b16 %v528, %v527
        %v532 = vpack.c.b16 %v530, %v529
        %535 = vmatprep.subr.bf16.mxu0 0
        %536 = vmatpush1.bf16.msra.mxu0 %v531
        %537 = vmatprep.subr.bf16.mxu0 0
        %538 = vmatpush1.bf16.msra.mxu0 %v532
        %539 = vmatprep.subr.bf16.mxu0 0
        %540 = vmatpush1.bf16.msra.mxu0 0
        %541 = vmatprep.subr.bf16.mxu0 0
        %542 = vmatpush1.bf16.msra.mxu0 0
        %543 = vmatprep.subr.bf16.mxu0 0
        %544 = vmatpush1.bf16.msra.mxu0 0
        %545 = vmatprep.subr.bf16.mxu0 0
        %546 = vmatpush1.bf16.msra.mxu0 0
        %547 = vmatprep.subr.bf16.mxu0 0
        %548 = vmatpush1.bf16.msra.mxu0 0
        %549 = vmatprep.subr.bf16.mxu0 0
        %550 = vmatpush1.bf16.msra.mxu0 0
        %551 = vmatprep.subr.bf16.mxu0 0
        %552 = vmatpush1.bf16.msra.mxu0 0
        %553 = vmatprep.subr.bf16.mxu0 0
        %554 = vmatpush1.bf16.msra.mxu0 0
        %555 = vmatprep.subr.bf16.mxu0 0
        %556 = vmatpush1.bf16.msra.mxu0 0
        %557 = vmatprep.subr.bf16.mxu0 0
        %558 = vmatpush1.bf16.msra.mxu0 0
        %559 = vmatprep.subr.bf16.mxu0 0
        %560 = vmatpush1.bf16.msra.mxu0 0
        %561 = vmatprep.subr.bf16.mxu0 0
        %562 = vmatpush1.bf16.msra.mxu0 0
        %563 = vmatprep.subr.bf16.mxu0 0
        %564 = vmatpush1.bf16.msra.mxu0 0
        %565 = vmatprep.subr.bf16.mxu0 0
        %566 = vmatpush1.bf16.msra.mxu0 0
        %567 = vmatprep.mubr.bf16.mxu0 0
        %568 = vmatmul.mubr.bf16.gmra.mrb[0].mxu0 %v477
        %v569 = vpop.f32.mrb[0].mxu0
        %v570 = vadd.f32 0.0, %v569
        %v571 = vpop.f32.mrb[0].mxu0
        %v572 = vpop.f32.mrb[0].mxu0
        %v573 = vpop.f32.mrb[0].mxu0
        %574 = vdwg.mxu0
        %v575 = vld [vmem:[#allocation5] sm:$0xf]
        %v576 = vld [vmem:[#allocation5 + $0x4] sm:$0xf]
        %v577 = vld [vmem:[#allocation5 + $0x8] sm:$0xf]
        %v578 = vld [vmem:[#allocation5 + $0xc] sm:$0xf]
        %v583 = vunpack.c.l.b16 %v575
        %v584 = vunpack.c.l.b16 %v576
        %v585 = vunpack.c.l.b16 %v577
        %v586 = vunpack.c.l.b16 %v578
        %v587 = vpack.c.b16 %v584, %v583
        %v588 = vpack.c.b16 %v586, %v585
        %591 = vmatprep.subr.bf16.mxu0 0
        %592 = vmatpush1.bf16.msra.mxu0 %v587
        %593 = vmatprep.subr.bf16.mxu0 0
        %594 = vmatpush1.bf16.msra.mxu0 %v588
        %595 = vmatprep.subr.bf16.mxu0 0
        %596 = vmatpush1.bf16.msra.mxu0 0
        %597 = vmatprep.subr.bf16.mxu0 0
        %598 = vmatpush1.bf16.msra.mxu0 0
        %599 = vmatprep.subr.bf16.mxu0 0
        %600 = vmatpush1.bf16.msra.mxu0 0
        %601 = vmatprep.subr.bf16.mxu0 0
        %602 = vmatpush1.bf16.msra.mxu0 0
        %603 = vmatprep.subr.bf16.mxu0 0
        %604 = vmatpush1.bf16.msra.mxu0 0
        %605 = vmatprep.subr.bf16.mxu0 0
        %606 = vmatpush1.bf16.msra.mxu0 0
        %607 = vmatprep.subr.bf16.mxu0 0
        %608 = vmatpush1.bf16.msra.mxu0 0
        %609 = vmatprep.subr.bf16.mxu0 0
        %610 = vmatpush1.bf16.msra.mxu0 0
        %611 = vmatprep.subr.bf16.mxu0 0
        %612 = vmatpush1.bf16.msra.mxu0 0
        %613 = vmatprep.subr.bf16.mxu0 0
        %614 = vmatpush1.bf16.msra.mxu0 0
        %615 = vmatprep.subr.bf16.mxu0 0
        %616 = vmatpush1.bf16.msra.mxu0 0
        %617 = vmatprep.subr.bf16.mxu0 0
        %618 = vmatpush1.bf16.msra.mxu0 0
        %619 = vmatprep.subr.bf16.mxu0 0
        %620 = vmatpush1.bf16.msra.mxu0 0
        %621 = vmatprep.subr.bf16.mxu0 0
        %622 = vmatpush1.bf16.msra.mxu0 0
        %623 = vmatprep.mubr.bf16.mxu0 0
        %624 = vmatmul.mubr.bf16.gmra.mrb[0].mxu0 %v477
        %v625 = vpop.f32.mrb[0].mxu0
        %v626 = vadd.f32 0.0, %v625
        %v627 = vpop.f32.mrb[0].mxu0
        %v628 = vpop.f32.mrb[0].mxu0
        %v629 = vpop.f32.mrb[0].mxu0
        %630 = vdwg.mxu0
        %v631 = vld [vmem:[%s434] sm:$0xff]
        %v632 = vld [vmem:[%s438] sm:$0xff]
        %v633 = vmul.f32 %v514, %v631
        %635 = vrot.lane.b32.xlu0 %v632, 4
        %v636 = vpop.permute.xlu0 %635
        %v638 = vmul.f32 %v514, %v636
        %640 = vrot.lane.b32.xlu0 %v638, 124
        %v641 = vpop.permute.xlu0 %640
        %v643 = vsub.f32 %v633, %v641
        %645 = vrot.lane.b32.xlu0 %v631, 4
        %v646 = vpop.permute.xlu0 %645
        %v648 = vmul.f32 %v514, %v646
        %v649 = vmul.f32 %v514, %v632
        %651 = vrot.lane.b32.xlu0 %v649, 4
        %v652 = vpop.permute.xlu0 %651
        %v654 = vadd.f32 %v648, %v652
        %v655 = vmul.f32 %v570, %v631
        %v656 = vmul.f32 %v570, %v636
        %658 = vrot.lane.b32.xlu0 %v656, 124
        %v659 = vpop.permute.xlu0 %658
        %v661 = vsub.f32 %v655, %v659
        %v662 = vmul.f32 %v570, %v646
        %v663 = vmul.f32 %v570, %v632
        %665 = vrot.lane.b32.xlu0 %v663, 4
        %v666 = vpop.permute.xlu0 %665
        %v668 = vadd.f32 %v662, %v666
        %669 = vrot.lane.b32.xlu0 %v631, 8
        %v670 = vpop.permute.xlu0 %669
        %v672 = vmul.f32 %v514, %v670
        %673 = vrot.lane.b32.xlu0 %v632, 12
        %v674 = vpop.permute.xlu0 %673
        %v676 = vmul.f32 %v514, %v674
        %678 = vrot.lane.b32.xlu0 %v676, 124
        %v679 = vpop.permute.xlu0 %678
        %v681 = vsub.f32 %v672, %v679
        %682 = vrot.lane.b32.xlu0 %v631, 12
        %v683 = vpop.permute.xlu0 %682
        %v685 = vmul.f32 %v514, %v683
        %686 = vrot.lane.b32.xlu0 %v632, 8
        %v687 = vpop.permute.xlu0 %686
        %v689 = vmul.f32 %v514, %v687
        %691 = vrot.lane.b32.xlu0 %v689, 4
        %v692 = vpop.permute.xlu0 %691
        %v694 = vadd.f32 %v685, %v692
        %v695 = vmul.f32 %v570, %v670
        %v696 = vmul.f32 %v570, %v674
        %698 = vrot.lane.b32.xlu0 %v696, 124
        %v699 = vpop.permute.xlu0 %698
        %v701 = vsub.f32 %v695, %v699
        %v702 = vmul.f32 %v570, %v683
        %v703 = vmul.f32 %v570, %v687
        %705 = vrot.lane.b32.xlu0 %v703, 4
        %v706 = vpop.permute.xlu0 %705
        %v708 = vadd.f32 %v702, %v706
        %709 = vrot.lane.b32.xlu0 %v631, 16
        %v710 = vpop.permute.xlu0 %709
        %v712 = vmul.f32 %v514, %v710
        %713 = vrot.lane.b32.xlu0 %v632, 20
        %v714 = vpop.permute.xlu0 %713
        %v716 = vmul.f32 %v514, %v714
        %718 = vrot.lane.b32.xlu0 %v716, 124
        %v719 = vpop.permute.xlu0 %718
        %v721 = vsub.f32 %v712, %v719
        %722 = vrot.lane.b32.xlu0 %v631, 20
        %v723 = vpop.permute.xlu0 %722
        %v725 = vmul.f32 %v514, %v723
        %726 = vrot.lane.b32.xlu0 %v632, 16
        %v727 = vpop.permute.xlu0 %726
        %v729 = vmul.f32 %v514, %v727
        %731 = vrot.lane.b32.xlu0 %v729, 4
        %v732 = vpop.permute.xlu0 %731
        %v734 = vadd.f32 %v725, %v732
        %v735 = vmul.f32 %v570, %v710
        %v736 = vmul.f32 %v570, %v714
        %738 = vrot.lane.b32.xlu0 %v736, 124
        %v739 = vpop.permute.xlu0 %738
        %v741 = vsub.f32 %v735, %v739
        %v742 = vmul.f32 %v570, %v723
        %v743 = vmul.f32 %v570, %v727
        %745 = vrot.lane.b32.xlu0 %v743, 4
        %v746 = vpop.permute.xlu0 %745
        %v748 = vadd.f32 %v742, %v746
        %749 = vrot.lane.b32.xlu0 %v631, 24
        %v750 = vpop.permute.xlu0 %749
        %v752 = vmul.f32 %v514, %v750
        %753 = vrot.lane.b32.xlu0 %v632, 28
        %v754 = vpop.permute.xlu0 %753
        %v756 = vmul.f32 %v514, %v754
        %758 = vrot.lane.b32.xlu0 %v756, 124
        %v759 = vpop.permute.xlu0 %758
        %v761 = vsub.f32 %v752, %v759
        %762 = vrot.lane.b32.xlu0 %v631, 28
        %v763 = vpop.permute.xlu0 %762
        %v765 = vmul.f32 %v514, %v763
        %766 = vrot.lane.b32.xlu0 %v632, 24
        %v767 = vpop.permute.xlu0 %766
        %v769 = vmul.f32 %v514, %v767
        %771 = vrot.lane.b32.xlu0 %v769, 4
        %v772 = vpop.permute.xlu0 %771
        %v774 = vadd.f32 %v765, %v772
        %v775 = vmul.f32 %v570, %v750
        %v776 = vmul.f32 %v570, %v754
        %778 = vrot.lane.b32.xlu0 %v776, 124
        %v779 = vpop.permute.xlu0 %778
        %v781 = vsub.f32 %v775, %v779
        %v782 = vmul.f32 %v570, %v763
        %v783 = vmul.f32 %v570, %v767
        %785 = vrot.lane.b32.xlu0 %v783, 4
        %v786 = vpop.permute.xlu0 %785
        %v788 = vadd.f32 %v782, %v786
        %vm789 = vcmask 31744
        %v790 = vsel %vm789, %v643, %v654
        %vm791 = vcmask 64512
        %v792 = vsel %vm791, %v790, %v681
        %vm793 = vcmask 97280
        %v794 = vsel %vm793, %v792, %v694
        %vm795 = vcmask 130048
        %v796 = vsel %vm795, %v794, %v721
        %vm797 = vcmask 162816
        %v798 = vsel %vm797, %v796, %v734
        %vm799 = vcmask 195584
        %v800 = vsel %vm799, %v798, %v761
        %vm801 = vcmask 228352
        %v802 = vsel %vm801, %v800, %v774
        %v803 = vpack.c.bf16 %v802, %v802
        %vm804 = vcmask 257024
        %805 = vst.msk [vmem:[%s409] sm:$0xf] %vm804, %v803
        %v806 = vsel %vm789, %v661, %v668
        %v807 = vsel %vm791, %v806, %v701
        %v808 = vsel %vm793, %v807, %v708
        %v809 = vsel %vm795, %v808, %v741
        %v810 = vsel %vm797, %v809, %v748
        %v811 = vsel %vm799, %v810, %v781
        %v812 = vsel %vm801, %v811, %v788
        %v813 = vpack.c.bf16 %v812, %v812
        %814 = vst.msk [vmem:[%s416] sm:$0xf] %vm804, %v813
        %v815 = vpack.c.bf16 %v626, %v626
        %816 = vst.msk [vmem:[%s423] sm:$0xf] %vm804, %v815
        %s817 = sand.u32 %s215, 1
        %s818 = scalar_lea.sflag [#allocation4], %s817
        %s819 = sand.u32 %s215, 1
        %s820 = smul.addr %s819, 4
        %s821 = scalar_lea.vmem [#allocation7], %s820
        %s822 = sand.u32 %s29, 1
        %s823 = scalar_lea.sflag [#allocation9], %s822
        %s824 = sand.u32 %s243, 1
        %s825 = smul.addr %s824, 4
        %s826 = scalar_lea.vmem [#allocation8], %s825
        %s827 = sand.u32 %s29, 1
        %s828 = scalar_lea.sflag [#allocation9], %s827
        %s829 = sand.u32 %s271, 1
        %s830 = smul.addr %s829, 4
        %s831 = scalar_lea.vmem [#allocation10], %s830
        // Predicated region
        $region57: #{tpu_custom_call.1} parent=47 // pred_check
          %p832 = pneg %p225
        $region58: #{tpu_custom_call.1} parent=47 // pred_check_branch
          %834 = sbr.rel (%p832) target = $region60
        $region59: #{tpu_custom_call.1} parent=47 // pred_region
          %s836 = ssub.s32 64, 64
          %837 = vsyncadd %s818, %s836
          %s838 = sadd.s32 %s34, %s33
          %s839 = smul.addr %s838, 64
          %s840 = scalar_lea.hbm %s7, %s839
          %s842 = sshll.u32 %s821, 4
          %s843 = int_to_ptr.vmem [resolvable:$true] %s842
          %845 = dma.vmem_to_hbm [thread:$0]  %s843, 64, %s840, %s818
        $region60: #{tpu_custom_call.1} parent=47 // pred_fallthru
          _
        // Predicated region
        $region61: #{tpu_custom_call.1} parent=47 // pred_check
          %p846 = pneg %p253
        $region62: #{tpu_custom_call.1} parent=47 // pred_check_branch
          %848 = sbr.rel (%p846) target = $region64
        $region63: #{tpu_custom_call.1} parent=47 // pred_region
          %s850 = ssub.s32 64, 64
          %851 = vsyncadd %s823, %s850
          %s852 = sadd.s32 %s34, %s33
          %s853 = smul.addr %s852, 64
          %s854 = scalar_lea.hbm %s8, %s853
          %s856 = sshll.u32 %s826, 4
          %s857 = int_to_ptr.vmem [resolvable:$true] %s856
          %859 = dma.vmem_to_hbm [thread:$0]  %s857, 64, %s854, %s823
        $region64: #{tpu_custom_call.1} parent=47 // pred_fallthru
          _
        // Predicated region
        $region65: #{tpu_custom_call.1} parent=47 // pred_check
          %p860 = pneg %p281
        $region66: #{tpu_custom_call.1} parent=47 // pred_check_branch
          %862 = sbr.rel (%p860) target = $region68
        $region67: #{tpu_custom_call.1} parent=47 // pred_region
          %s864 = ssub.s32 64, 64
          %865 = vsyncadd %s828, %s864
          %s866 = sadd.s32 %s34, %s33
          %s867 = smul.addr %s866, 64
          %s868 = scalar_lea.hbm %s9, %s867
          %s870 = sshll.u32 %s831, 4
          %s871 = int_to_ptr.vmem [resolvable:$true] %s870
          %873 = dma.vmem_to_hbm [thread:$0]  %s871, 64, %s868, %s828
        $region68: #{tpu_custom_call.1} parent=47 // pred_fallthru
          _
      $region48: #{tpu_custom_call.1} parent=5 // pred_fallthru
        _
      %p874 = scmp.le.s32.totalorder 2, %s24
      // Predicated region
      $region69: #{tpu_custom_call.1} parent=5 // pred_check
        %p875 = pneg %p874
      $region70: #{tpu_custom_call.1} parent=5 // pred_check_branch
        %877 = sbr.rel (%p875) target = $region72
      $region71: #{tpu_custom_call.1} parent=5 // pred_region
        %s878 = ssub.s32 %s24, 2
        // Predicated region
        $region73: #{tpu_custom_call.1} parent=71 // pred_check
          %p879 = pneg %p231
        $region74: #{tpu_custom_call.1} parent=71 // pred_check_branch
          %881 = sbr.rel (%p879) target = $region76
        $region75: #{tpu_custom_call.1} parent=71 // pred_region
          %s882 = sand.u32 %s216, 1
          %s883 = scalar_lea.sflag [#allocation4], %s882
          %s884 = sand.u32 %s216, 1
          %s885 = smul.addr %s884, 4
          %s886 = scalar_lea.vmem [#allocation7], %s885
          %887 = dma.done %s883, 64
        $region76: #{tpu_custom_call.1} parent=71 // pred_fallthru
          _
        // Predicated region
        $region77: #{tpu_custom_call.1} parent=71 // pred_check
          %p888 = pneg %p259
        $region78: #{tpu_custom_call.1} parent=71 // pred_check_branch
          %890 = sbr.rel (%p888) target = $region80
        $region79: #{tpu_custom_call.1} parent=71 // pred_region
          %s891 = sand.u32 %s30, 1
          %s892 = scalar_lea.sflag [#allocation9], %s891
          %s893 = sand.u32 %s244, 1
          %s894 = smul.addr %s893, 4
          %s895 = scalar_lea.vmem [#allocation8], %s894
          %896 = dma.done %s892, 64
        $region80: #{tpu_custom_call.1} parent=71 // pred_fallthru
          _
        // Predicated region
        $region81: #{tpu_custom_call.1} parent=71 // pred_check
          %p897 = pneg %p287
        $region82: #{tpu_custom_call.1} parent=71 // pred_check_branch
          %899 = sbr.rel (%p897) target = $region84
        $region83: #{tpu_custom_call.1} parent=71 // pred_region
          %s900 = sand.u32 %s30, 1
          %s901 = scalar_lea.sflag [#allocation9], %s900
          %s902 = sand.u32 %s272, 1
          %s903 = smul.addr %s902, 4
          %s904 = scalar_lea.vmem [#allocation10], %s903
          %905 = dma.done %s901, 64
        $region84: #{tpu_custom_call.1} parent=71 // pred_fallthru
          _
      $region72: #{tpu_custom_call.1} parent=5 // pred_fallthru
        _
    $region6: #{tpu_custom_call.1} parent=1 // loop_footer
      %s28 = sadd.s32 1, %s24
    $region7: #{tpu_custom_call.1} parent=1 // loop_footer_branch
      %23 = sbr.rel target = $region3
    $region8: #{tpu_custom_call.1} parent=1 // loop_exit
      _
    %906 = vsyncpa [#allocation3], 1
    %s907 = scalar_lea.sflag [#allocation3], 1
    %908 = vsyncpa %s907, 1
    %909 = vsyncpa [#allocation6], 1
    %910 = vsyncpa [#allocation4], 1
    %s911 = scalar_lea.sflag [#allocation4], 1
    %912 = vsyncpa %s911, 1
    %913 = vsyncpa [#allocation9], 1
    %s914 = scalar_lea.sflag [#allocation9], 1
    %915 = vsyncpa %s914, 1

</llo_original>
